<compile_context>
chip_gen: v7x
topology: tpu7x:2x2x1
jax: 0.10.0
libtpu: 0.0.40
codegen_flags: <defaults>
</compile_context>

<pallas_src>
import jax
import jax.numpy as jnp
import numpy as np
from jax.experimental import pallas as pl
from jax.experimental.pallas import tpu as pltpu


def _make_edge_kernel(level, h, w):
    """Kernel over one (blk, h, w) tile of both images.

    Writes, for each level l, the lane partial sums of |grad_x(d_l)| and
    |grad_y(d_l)| (d_l = level-l nearest-downsampled difference image) into a
    packed (1, 2*level, w) output block.
    """

    def kernel(a_ref, b_ref, rmask_ref, cmask_ref, out_ref):
        # In-kernel upcast: narrow (bf16) inputs are DMA'd narrow, math in f32.
        d = a_ref[...].astype(jnp.float32) - b_ref[...].astype(jnp.float32)

        # Zero the packed partial tile once (gy rows only fill w - s lanes).
        out_ref[...] = jnp.zeros((1, 2 * level, w), dtype=jnp.float32)

        for l in range(level):  # static unroll over scales
            s = 1 << l
            # grad of the level-l image == stride-s shifted difference of d,
            # restricted to rows/cols that are multiples of s.  The row/col
            # selection masks commute with the sums, so they are applied to
            # the (h, .) / (., w) partials, not per element.

            # ---- x-gradient (rows) --------------------------------------
            ax = jnp.abs(d[:, s:, :] - d[:, :-s, :])          # (blk, h-s, w)
            sx = jnp.sum(ax, axis=0)                          # (h-s, w) VPU adds
            if s > 1:
                sx = sx * rmask_ref[l, : h - s, :]            # resident row mask
            px = jnp.sum(sx, axis=0, keepdims=True)           # (1, w) lane partial
            if s > 1:
                px = px * cmask_ref[l]                        # resident col mask
            out_ref[:, 2 * l, :] = px

            # ---- y-gradient (cols) --------------------------------------
            ay = jnp.abs(d[:, :, s:] - d[:, :, :-s])          # (blk, h, w-s)
            sy = jnp.sum(ay, axis=0)                          # (h, w-s)
            if s > 1:
                sy = sy * rmask_ref[l]                        # (h, 1) broadcast
            py = jnp.sum(sy, axis=0, keepdims=True)           # (1, w-s)
            if s > 1:
                py = py * cmask_ref[l, :, : w - s]
            out_ref[:, 2 * l + 1, : w - s] = py

    return kernel


def _vmem_capacity_bytes():
    try:
        return int(pltpu.get_tpu_info().vmem_capacity_bytes)
    except Exception:
        return 64 * 1024 * 1024  # conservative fallback (v7x per-TensorCore VMEM)


def _choose_blocking(nc, h, w, in_itemsize, level, vmem_cap):
    """Pick (block_nc, num_blocks) from the chip's VMEM budget."""
    hp = -(-h // 8) * 8
    wp = -(-w // 128) * 128
    # 2 inputs x 2 pipeline buffers at native width + ~6 f32-sized live
    # temporaries (d, shifted slices, |.|, stage sums) per block slice.
    per_slice = hp * wp * (4 * in_itemsize + 6 * 4)
    # Resident mask inputs (double-buffered) + packed output buffers.
    fixed = 2 * level * (hp * 128 + 8 * wp) * 4 + 4 * 2 * level * wp * 4
    budget = max(int(0.40 * vmem_cap) - fixed, per_slice)
    blk = max(1, min(nc, budget // per_slice))
    num_blocks = -(-nc // blk)
    if nc >= 2 and num_blocks % 2:
        # Even grid so both v7x TensorCores get work under "parallel"
        # (harmless on single-TensorCore v5e/v6e).
        num_blocks += 1
        blk = -(-nc // num_blocks)
    return int(blk), int(num_blocks)


def multi_scale_edge_loss(img1, img2, level=3):
    """Pallas implementation of MultiScaleEdgeLoss.forward (NCHW inputs)."""
    assert img1.shape == img2.shape, "img1/img2 shapes must match"
    assert level >= 1
    n, c, h, w = img1.shape
    nc = n * c
    scale = 1 << (level - 1)
    # TODO(synk): odd spatial sizes (F.interpolate nearest floor semantics) are
    # not handled; h, w must be divisible by 2^(level-1) so nearest 0.5x == ::2.
    assert h % scale == 0 and w % scale == 0 and h // scale >= 2 and w // scale >= 2

    a = img1.reshape(nc, h, w)
    b = img2.reshape(nc, h, w)

    vmem_cap = _vmem_capacity_bytes()
    itemsize = jnp.dtype(img1.dtype).itemsize
    blk, num_blocks = _choose_blocking(nc, h, w, itemsize, level, vmem_cap)
    nc_pad = blk * num_blocks
    if nc_pad != nc:
        pad = ((0, nc_pad - nc), (0, 0), (0, 0))
        a = jnp.pad(a, pad)  # zero padding contributes |0-0| = 0 to every sum
        b = jnp.pad(b, pad)

    # Per-level nearest-downsample selection as separable 0/1 row/col vectors,
    # DMA'd once and kept resident via constant index_maps.
    lvl = (1 << np.arange(level))[:, None]
    rmasks = jnp.asarray((np.arange(h)[None, :] % lvl == 0)
                         .astype(np.float32).reshape(level, h, 1))
    cmasks = jnp.asarray((np.arange(w)[None, :] % lvl == 0)
                         .astype(np.float32).reshape(level, 1, w))

    kernel = _make_edge_kernel(level, h, w)
    partials = pl.pallas_call(
        kernel,
        grid=(num_blocks,),
        in_specs=[
            pl.BlockSpec((blk, h, w), lambda i: (i, 0, 0)),
            pl.BlockSpec((blk, h, w), lambda i: (i, 0, 0)),
            pl.BlockSpec((level, h, 1), lambda i: (0, 0, 0)),  # resident masks
            pl.BlockSpec((level, 1, w), lambda i: (0, 0, 0)),
        ],
        out_specs=pl.BlockSpec((1, 2 * level, w), lambda i: (i, 0, 0)),
        out_shape=jax.ShapeDtypeStruct((num_blocks, 2 * level, w), jnp.float32),
        compiler_params=pltpu.CompilerParams(
            dimension_semantics=("parallel",),
            vmem_limit_bytes=int(0.75 * vmem_cap),
        ),
    )(a, b, rmasks, cmasks)

    # Tiny cross-block / cross-lane sums + torch.mean denominators in plain JAX.
    gx_terms, gy_terms = [], []
    for l in range(level):
        s = 1 << l
        hl, wl = h // s, w // s
        gx_sum = jnp.sum(partials[:, 2 * l, :])
        gy_sum = jnp.sum(partials[:, 2 * l + 1, : w - s])
        gx_terms.append(gx_sum / (nc * (hl - 1) * wl))   # mean(|gradx1 - gradx2|)
        gy_terms.append(gy_sum / (nc * hl * (wl - 1)))   # mean(|grady1 - grady2|)
    gx = sum(gx_terms) / level
    gy = sum(gy_terms) / level
    return (gx + gy) / 2.0


def _reference(img1, img2, level=3):
    """Pure-jnp reference mirroring the PyTorch module."""
    a = img1.astype(jnp.float32)
    b = img2.astype(jnp.float32)
    gxs, gys = [], []
    for _ in range(level):
        gx1 = a[:, :, 1:, :] - a[:, :, :-1, :]
        gy1 = a[:, :, :, 1:] - a[:, :, :, :-1]
        gx2 = b[:, :, 1:, :] - b[:, :, :-1, :]
        gy2 = b[:, :, :, 1:] - b[:, :, :, :-1]
        gxs.append(jnp.mean(jnp.abs(gx1 - gx2)))
        gys.append(jnp.mean(jnp.abs(gy1 - gy2)))
        a = a[:, :, ::2, ::2]
        b = b[:, :, ::2, ::2]
    return (sum(gxs) / len(gxs) + sum(gys) / len(gys)) / 2.0


if __name__ == "__main__":
    key = jax.random.PRNGKey(0)
    k1, k2 = jax.random.split(key)
    # Small shapes consistent with the module: batch=2, channels=4, spatial=16.
    img1 = jax.random.normal(k1, (2, 4, 16, 16), dtype=jnp.float32)
    img2 = jax.random.normal(k2, (2, 4, 16, 16), dtype=jnp.float32)

    loss = jax.block_until_ready(multi_scale_edge_loss(img1, img2, level=3))
    ref = jax.block_until_ready(_reference(img1, img2, level=3))
    assert np.allclose(np.asarray(loss), np.asarray(ref), rtol=1e-5, atol=1e-6), (
        float(loss), float(ref))

    # bf16 inputs: half the HBM traffic (kernel up-casts and accumulates in f32).
    loss_bf = jax.block_until_ready(
        multi_scale_edge_loss(img1.astype(jnp.bfloat16),
                              img2.astype(jnp.bfloat16), level=3))
    ref_bf = jax.block_until_ready(
        _reference(img1.astype(jnp.bfloat16), img2.astype(jnp.bfloat16), level=3))
    assert np.allclose(np.asarray(loss_bf), np.asarray(ref_bf),
                       rtol=2e-3, atol=1e-5), (float(loss_bf), float(ref_bf))

    # Ragged N*C: exercises zero-padding + even-grid rebalancing.
    k3, k4 = jax.random.split(k2)
    a3 = jax.random.normal(k3, (1, 3, 16, 16), dtype=jnp.float32)
    b3 = jax.random.normal(k4, (1, 3, 16, 16), dtype=jnp.float32)
    loss3 = jax.block_until_ready(multi_scale_edge_loss(a3, b3, level=3))
    ref3 = jax.block_until_ready(_reference(a3, b3, level=3))
    assert np.allclose(np.asarray(loss3), np.asarray(ref3), rtol=1e-5, atol=1e-6), (
        float(loss3), float(ref3))

    print("KERNEL_OK")
</pallas_src>

<mosaic_0001>
module attributes {stable_mosaic.version = 11 : i64} {
  func.func @kernel(%arg0: i32, %arg1: memref<4x16x16xf32, #tpu.memory_space<vmem>>, %arg2: memref<4x16x16xf32, #tpu.memory_space<vmem>>, %arg3: memref<3x16x1xf32, #tpu.memory_space<vmem>>, %arg4: memref<3x1x16xf32, #tpu.memory_space<vmem>>, %arg5: memref<1x6x16xf32, #tpu.memory_space<vmem>>) attributes {dimension_semantics = [#tpu.dimension_semantics<parallel>], iteration_bounds = array<i64: 2>, scalar_prefetch = 0 : i64, scratch_operands = 0 : i64, tpu.core_type = #tpu.core_type<tc>, window_params = [{transform_indices = @transform_0, window_bounds = array<i64: 4, 16, 16>}, {transform_indices = @transform_1, window_bounds = array<i64: 4, 16, 16>}, {pipeline_mode = #tpu.pipeline_mode<synchronous>, transform_indices = @transform_2, window_bounds = array<i64: 3, 16, 1>}, {pipeline_mode = #tpu.pipeline_mode<synchronous>, transform_indices = @transform_3, window_bounds = array<i64: 3, 1, 16>}, {transform_indices = @transform_4, window_bounds = array<i64: 1, 6, 16>}]} {
    %c0 = arith.constant 0 : index
    %c0_0 = arith.constant 0 : index
    %c0_1 = arith.constant 0 : index
    %0 = vector.load %arg1[%c0, %c0_0, %c0_1] : memref<4x16x16xf32, #tpu.memory_space<vmem>>, vector<4x16x16xf32>
    %c0_2 = arith.constant 0 : index
    %c0_3 = arith.constant 0 : index
    %c0_4 = arith.constant 0 : index
    %1 = vector.load %arg2[%c0_2, %c0_3, %c0_4] : memref<4x16x16xf32, #tpu.memory_space<vmem>>, vector<4x16x16xf32>
    %2 = arith.subf %0, %1 : vector<4x16x16xf32>
    %cst = arith.constant 0.000000e+00 : f32
    %3 = vector.broadcast %cst : f32 to vector<1x6x16xf32>
    %c0_5 = arith.constant 0 : index
    %c0_6 = arith.constant 0 : index
    %c0_7 = arith.constant 0 : index
    %4 = vector.load %arg5[%c0_5, %c0_6, %c0_7] : memref<1x6x16xf32, #tpu.memory_space<vmem>>, vector<1x6x16xf32>
    tpu.vector_store %arg5[%c0_5, %c0_6, %c0_7], %3 {strides = array<i32>} : memref<1x6x16xf32, #tpu.memory_space<vmem>>, vector<1x6x16xf32>,
    %5 = vector.extract_strided_slice %2 {offsets = [0, 1, 0], sizes = [4, 15, 16], strides = [1, 1, 1]} : vector<4x16x16xf32> to vector<4x15x16xf32>
    %6 = vector.extract_strided_slice %2 {offsets = [0, 0, 0], sizes = [4, 15, 16], strides = [1, 1, 1]} : vector<4x16x16xf32> to vector<4x15x16xf32>
    %7 = arith.subf %5, %6 : vector<4x15x16xf32>
    %8 = math.absf %7 : vector<4x15x16xf32>
    %cst_8 = arith.constant dense<0.000000e+00> : vector<15x16xf32>
    %9 = vector.multi_reduction <add>, %8, %cst_8 [0] : vector<4x15x16xf32> to vector<15x16xf32>
    %cst_9 = arith.constant dense<0.000000e+00> : vector<16xf32>
    %10 = vector.multi_reduction <add>, %9, %cst_9 [0] : vector<15x16xf32> to vector<16xf32>
    %11 = vector.shape_cast %10 : vector<16xf32> to vector<1x16xf32>
    %c0_10 = arith.constant 0 : index
    %c0_11 = arith.constant 0 : index
    %c0_12 = arith.constant 0 : index
    %12 = vector.load %arg5[%c0_10, %c0_11, %c0_12] : memref<1x6x16xf32, #tpu.memory_space<vmem>>, vector<1x1x16xf32>
    %13 = vector.shape_cast %12 : vector<1x1x16xf32> to vector<1x16xf32>
    %14 = vector.shape_cast %11 : vector<1x16xf32> to vector<1x1x16xf32>
    tpu.vector_store %arg5[%c0_10, %c0_11, %c0_12], %14 {strides = array<i32>} : memref<1x6x16xf32, #tpu.memory_space<vmem>>, vector<1x1x16xf32>,
    %15 = vector.extract_strided_slice %2 {offsets = [0, 0, 1], sizes = [4, 16, 15], strides = [1, 1, 1]} : vector<4x16x16xf32> to vector<4x16x15xf32>
    %16 = vector.extract_strided_slice %2 {offsets = [0, 0, 0], sizes = [4, 16, 15], strides = [1, 1, 1]} : vector<4x16x16xf32> to vector<4x16x15xf32>
    %17 = arith.subf %15, %16 : vector<4x16x15xf32>
    %18 = math.absf %17 : vector<4x16x15xf32>
    %cst_13 = arith.constant dense<0.000000e+00> : vector<16x15xf32>
    %19 = vector.multi_reduction <add>, %18, %cst_13 [0] : vector<4x16x15xf32> to vector<16x15xf32>
    %cst_14 = arith.constant dense<0.000000e+00> : vector<15xf32>
    %20 = vector.multi_reduction <add>, %19, %cst_14 [0] : vector<16x15xf32> to vector<15xf32>
    %21 = vector.shape_cast %20 : vector<15xf32> to vector<1x15xf32>
    %c0_15 = arith.constant 0 : index
    %c1 = arith.constant 1 : index
    %c0_16 = arith.constant 0 : index
    %22 = vector.load %arg5[%c0_15, %c1, %c0_16] : memref<1x6x16xf32, #tpu.memory_space<vmem>>, vector<1x1x15xf32>
    %23 = vector.shape_cast %22 : vector<1x1x15xf32> to vector<1x15xf32>
    %24 = vector.shape_cast %21 : vector<1x15xf32> to vector<1x1x15xf32>
    tpu.vector_store %arg5[%c0_15, %c1, %c0_16], %24 {strides = array<i32>} : memref<1x6x16xf32, #tpu.memory_space<vmem>>, vector<1x1x15xf32>,
    %25 = vector.extract_strided_slice %2 {offsets = [0, 2, 0], sizes = [4, 14, 16], strides = [1, 1, 1]} : vector<4x16x16xf32> to vector<4x14x16xf32>
    %26 = vector.extract_strided_slice %2 {offsets = [0, 0, 0], sizes = [4, 14, 16], strides = [1, 1, 1]} : vector<4x16x16xf32> to vector<4x14x16xf32>
    %27 = arith.subf %25, %26 : vector<4x14x16xf32>
    %28 = math.absf %27 : vector<4x14x16xf32>
    %cst_17 = arith.constant dense<0.000000e+00> : vector<14x16xf32>
    %29 = vector.multi_reduction <add>, %28, %cst_17 [0] : vector<4x14x16xf32> to vector<14x16xf32>
    %c1_18 = arith.constant 1 : index
    %c0_19 = arith.constant 0 : index
    %c0_20 = arith.constant 0 : index
    %30 = vector.load %arg3[%c1_18, %c0_19, %c0_20] : memref<3x16x1xf32, #tpu.memory_space<vmem>>, vector<1x14x1xf32>
    %31 = vector.shape_cast %30 : vector<1x14x1xf32> to vector<14x1xf32>
    %32 = vector.broadcast %31 : vector<14x1xf32> to vector<14x16xf32>
    %33 = arith.mulf %29, %32 : vector<14x16xf32>
    %cst_21 = arith.constant dense<0.000000e+00> : vector<16xf32>
    %34 = vector.multi_reduction <add>, %33, %cst_21 [0] : vector<14x16xf32> to vector<16xf32>
    %35 = vector.shape_cast %34 : vector<16xf32> to vector<1x16xf32>
    %c1_22 = arith.constant 1 : index
    %c0_23 = arith.constant 0 : index
    %c0_24 = arith.constant 0 : index
    %36 = vector.load %arg4[%c1_22, %c0_23, %c0_24] : memref<3x1x16xf32, #tpu.memory_space<vmem>>, vector<1x1x16xf32>
    %37 = vector.shape_cast %36 : vector<1x1x16xf32> to vector<1x16xf32>
    %38 = arith.mulf %35, %37 : vector<1x16xf32>
    %c0_25 = arith.constant 0 : index
    %c2 = arith.constant 2 : index
    %c0_26 = arith.constant 0 : index
    %39 = vector.load %arg5[%c0_25, %c2, %c0_26] : memref<1x6x16xf32, #tpu.memory_space<vmem>>, vector<1x1x16xf32>
    %40 = vector.shape_cast %39 : vector<1x1x16xf32> to vector<1x16xf32>
    %41 = vector.shape_cast %38 : vector<1x16xf32> to vector<1x1x16xf32>
    tpu.vector_store %arg5[%c0_25, %c2, %c0_26], %41 {strides = array<i32>} : memref<1x6x16xf32, #tpu.memory_space<vmem>>, vector<1x1x16xf32>,
    %42 = vector.extract_strided_slice %2 {offsets = [0, 0, 2], sizes = [4, 16, 14], strides = [1, 1, 1]} : vector<4x16x16xf32> to vector<4x16x14xf32>
    %43 = vector.extract_strided_slice %2 {offsets = [0, 0, 0], sizes = [4, 16, 14], strides = [1, 1, 1]} : vector<4x16x16xf32> to vector<4x16x14xf32>
    %44 = arith.subf %42, %43 : vector<4x16x14xf32>
    %45 = math.absf %44 : vector<4x16x14xf32>
    %cst_27 = arith.constant dense<0.000000e+00> : vector<16x14xf32>
    %46 = vector.multi_reduction <add>, %45, %cst_27 [0] : vector<4x16x14xf32> to vector<16x14xf32>
    %c1_28 = arith.constant 1 : index
    %c0_29 = arith.constant 0 : index
    %c0_30 = arith.constant 0 : index
    %47 = vector.load %arg3[%c1_28, %c0_29, %c0_30] : memref<3x16x1xf32, #tpu.memory_space<vmem>>, vector<1x16x1xf32>
    %48 = vector.shape_cast %47 : vector<1x16x1xf32> to vector<16x1xf32>
    %49 = vector.broadcast %48 : vector<16x1xf32> to vector<16x14xf32>
    %50 = arith.mulf %46, %49 : vector<16x14xf32>
    %cst_31 = arith.constant dense<0.000000e+00> : vector<14xf32>
    %51 = vector.multi_reduction <add>, %50, %cst_31 [0] : vector<16x14xf32> to vector<14xf32>
    %52 = vector.shape_cast %51 : vector<14xf32> to vector<1x14xf32>
    %c1_32 = arith.constant 1 : index
    %c0_33 = arith.constant 0 : index
    %c0_34 = arith.constant 0 : index
    %53 = vector.load %arg4[%c1_32, %c0_33, %c0_34] : memref<3x1x16xf32, #tpu.memory_space<vmem>>, vector<1x1x14xf32>
    %54 = vector.shape_cast %53 : vector<1x1x14xf32> to vector<1x14xf32>
    %55 = arith.mulf %52, %54 : vector<1x14xf32>
    %c0_35 = arith.constant 0 : index
    %c3 = arith.constant 3 : index
    %c0_36 = arith.constant 0 : index
    %56 = vector.load %arg5[%c0_35, %c3, %c0_36] : memref<1x6x16xf32, #tpu.memory_space<vmem>>, vector<1x1x14xf32>
    %57 = vector.shape_cast %56 : vector<1x1x14xf32> to vector<1x14xf32>
    %58 = vector.shape_cast %55 : vector<1x14xf32> to vector<1x1x14xf32>
    tpu.vector_store %arg5[%c0_35, %c3, %c0_36], %58 {strides = array<i32>} : memref<1x6x16xf32, #tpu.memory_space<vmem>>, vector<1x1x14xf32>,
    %59 = vector.extract_strided_slice %2 {offsets = [0, 4, 0], sizes = [4, 12, 16], strides = [1, 1, 1]} : vector<4x16x16xf32> to vector<4x12x16xf32>
    %60 = vector.extract_strided_slice %2 {offsets = [0, 0, 0], sizes = [4, 12, 16], strides = [1, 1, 1]} : vector<4x16x16xf32> to vector<4x12x16xf32>
    %61 = arith.subf %59, %60 : vector<4x12x16xf32>
    %62 = math.absf %61 : vector<4x12x16xf32>
    %cst_37 = arith.constant dense<0.000000e+00> : vector<12x16xf32>
    %63 = vector.multi_reduction <add>, %62, %cst_37 [0] : vector<4x12x16xf32> to vector<12x16xf32>
    %c2_38 = arith.constant 2 : index
    %c0_39 = arith.constant 0 : index
    %c0_40 = arith.constant 0 : index
    %64 = vector.load %arg3[%c2_38, %c0_39, %c0_40] : memref<3x16x1xf32, #tpu.memory_space<vmem>>, vector<1x12x1xf32>
    %65 = vector.shape_cast %64 : vector<1x12x1xf32> to vector<12x1xf32>
    %66 = vector.broadcast %65 : vector<12x1xf32> to vector<12x16xf32>
    %67 = arith.mulf %63, %66 : vector<12x16xf32>
    %cst_41 = arith.constant dense<0.000000e+00> : vector<16xf32>
    %68 = vector.multi_reduction <add>, %67, %cst_41 [0] : vector<12x16xf32> to vector<16xf32>
    %69 = vector.shape_cast %68 : vector<16xf32> to vector<1x16xf32>
    %c2_42 = arith.constant 2 : index
    %c0_43 = arith.constant 0 : index
    %c0_44 = arith.constant 0 : index
    %70 = vector.load %arg4[%c2_42, %c0_43, %c0_44] : memref<3x1x16xf32, #tpu.memory_space<vmem>>, vector<1x1x16xf32>
    %71 = vector.shape_cast %70 : vector<1x1x16xf32> to vector<1x16xf32>
    %72 = arith.mulf %69, %71 : vector<1x16xf32>
    %c0_45 = arith.constant 0 : index
    %c4 = arith.constant 4 : index
    %c0_46 = arith.constant 0 : index
    %73 = vector.load %arg5[%c0_45, %c4, %c0_46] : memref<1x6x16xf32, #tpu.memory_space<vmem>>, vector<1x1x16xf32>
    %74 = vector.shape_cast %73 : vector<1x1x16xf32> to vector<1x16xf32>
    %75 = vector.shape_cast %72 : vector<1x16xf32> to vector<1x1x16xf32>
    tpu.vector_store %arg5[%c0_45, %c4, %c0_46], %75 {strides = array<i32>} : memref<1x6x16xf32, #tpu.memory_space<vmem>>, vector<1x1x16xf32>,
    %76 = vector.extract_strided_slice %2 {offsets = [0, 0, 4], sizes = [4, 16, 12], strides = [1, 1, 1]} : vector<4x16x16xf32> to vector<4x16x12xf32>
    %77 = vector.extract_strided_slice %2 {offsets = [0, 0, 0], sizes = [4, 16, 12], strides = [1, 1, 1]} : vector<4x16x16xf32> to vector<4x16x12xf32>
    %78 = arith.subf %76, %77 : vector<4x16x12xf32>
    %79 = math.absf %78 : vector<4x16x12xf32>
    %cst_47 = arith.constant dense<0.000000e+00> : vector<16x12xf32>
    %80 = vector.multi_reduction <add>, %79, %cst_47 [0] : vector<4x16x12xf32> to vector<16x12xf32>
    %c2_48 = arith.constant 2 : index
    %c0_49 = arith.constant 0 : index
    %c0_50 = arith.constant 0 : index
    %81 = vector.load %arg3[%c2_48, %c0_49, %c0_50] : memref<3x16x1xf32, #tpu.memory_space<vmem>>, vector<1x16x1xf32>
    %82 = vector.shape_cast %81 : vector<1x16x1xf32> to vector<16x1xf32>
    %83 = vector.broadcast %82 : vector<16x1xf32> to vector<16x12xf32>
    %84 = arith.mulf %80, %83 : vector<16x12xf32>
    %cst_51 = arith.constant dense<0.000000e+00> : vector<12xf32>
    %85 = vector.multi_reduction <add>, %84, %cst_51 [0] : vector<16x12xf32> to vector<12xf32>
    %86 = vector.shape_cast %85 : vector<12xf32> to vector<1x12xf32>
    %c2_52 = arith.constant 2 : index
    %c0_53 = arith.constant 0 : index
    %c0_54 = arith.constant 0 : index
    %87 = vector.load %arg4[%c2_52, %c0_53, %c0_54] : memref<3x1x16xf32, #tpu.memory_space<vmem>>, vector<1x1x12xf32>
    %88 = vector.shape_cast %87 : vector<1x1x12xf32> to vector<1x12xf32>
    %89 = arith.mulf %86, %88 : vector<1x12xf32>
    %c0_55 = arith.constant 0 : index
    %c5 = arith.constant 5 : index
    %c0_56 = arith.constant 0 : index
    %90 = vector.load %arg5[%c0_55, %c5, %c0_56] : memref<1x6x16xf32, #tpu.memory_space<vmem>>, vector<1x1x12xf32>
    %91 = vector.shape_cast %90 : vector<1x1x12xf32> to vector<1x12xf32>
    %92 = vector.shape_cast %89 : vector<1x12xf32> to vector<1x1x12xf32>
    tpu.vector_store %arg5[%c0_55, %c5, %c0_56], %92 {strides = array<i32>} : memref<1x6x16xf32, #tpu.memory_space<vmem>>, vector<1x1x12xf32>,
    return
  }
  func.func @transform_0(%arg0: i32) -> (i32, i32, i32) {
    %c0_i32 = arith.constant 0 : i32
    %c0_i32_0 = arith.constant 0 : i32
    %c0_i32_1 = arith.constant 0 : i32
    return %arg0, %c0_i32, %c0_i32_0 : i32, i32, i32
  }
  func.func @transform_1(%arg0: i32) -> (i32, i32, i32) {
    %c0_i32 = arith.constant 0 : i32
    %c0_i32_0 = arith.constant 0 : i32
    %c0_i32_1 = arith.constant 0 : i32
    return %arg0, %c0_i32, %c0_i32_0 : i32, i32, i32
  }
  func.func @transform_2(%arg0: i32) -> (i32, i32, i32) {
    %c0_i32 = arith.constant 0 : i32
    %c0_i32_0 = arith.constant 0 : i32
    %c0_i32_1 = arith.constant 0 : i32
    %c0_i32_2 = arith.constant 0 : i32
    return %c0_i32, %c0_i32_0, %c0_i32_1 : i32, i32, i32
  }
  func.func @transform_3(%arg0: i32) -> (i32, i32, i32) {
    %c0_i32 = arith.constant 0 : i32
    %c0_i32_0 = arith.constant 0 : i32
    %c0_i32_1 = arith.constant 0 : i32
    %c0_i32_2 = arith.constant 0 : i32
    return %c0_i32, %c0_i32_0, %c0_i32_1 : i32, i32, i32
  }
  func.func @transform_4(%arg0: i32) -> (i32, i32, i32) {
    %c0_i32 = arith.constant 0 : i32
    %c0_i32_0 = arith.constant 0 : i32
    %c0_i32_1 = arith.constant 0 : i32
    return %arg0, %c0_i32, %c0_i32_0 : i32, i32, i32
  }
}

</mosaic_0001>

<llo_original>
// kernel: tpu_custom_call.1
$region0: #{tpu_custom_call.1}
  #allocation0 [shape = 'u32[]', space=smem, size = 0x4, offset = 0x4, fixed_abs, tag = 'smem constant byte address 0x4 - core index']
  #allocation1 [shape = 'u32[144,128]{1,0:T(1,128)}', space=vmem, size = 0x12000, scoped, tag = 'internal scratch']
  %s0 = inlined_call_operand.hbm [shape: f32[8,16,16], index: 0, kind: input, shape index: {}]
  %s1 = inlined_call_operand.hbm [shape: f32[8,16,16], index: 1, kind: input, shape index: {}]
  %s2 = inlined_call_operand.vmem [shape: f32[3,16,1], index: 2, kind: input, shape index: {}]
  %s3 = inlined_call_operand.vmem [shape: f32[3,1,16], index: 3, kind: input, shape index: {}]
  %s4 = inlined_call_operand.vmem [shape: f32[2,6,16], index: 4, kind: output, shape index: {}]
  %s5 = sld [smem:[#allocation0]]
  $region57: #{tpu_custom_call.1} parent=0
    _
  %s7 = ssub.s32 1, %s5
  %s8 = scalar_select 0, %s7, %s5
  $region1: #{tpu_custom_call.1} parent=0
    #allocation2 [shape = 'u8[65536]{0}', space=vmem, size = 0x10000, scoped, tag = 'input window, operand 0']
    #allocation3 [shape = 's32[2]{0}', space=sflag, size = 0x8, scoped, tag = 'scoped memory for tpu_custom_call.1']
    #allocation4 [shape = 'u8[65536]{0}', space=vmem, size = 0x10000, scoped, tag = 'input window, operand 1']
    #allocation5 [shape = 's32[2]{0}', space=sflag, size = 0x8, scoped, tag = 'scoped memory for tpu_custom_call.1']
    %9 = vsyncpa [#allocation3], 0
    %s10 = scalar_lea.sflag [#allocation3], 1
    %11 = vsyncpa %s10, 0
    %12 = vsyncpa [#allocation5], 0
    %s13 = scalar_lea.sflag [#allocation5], 1
    %14 = vsyncpa %s13, 0
    loop: start=0, step=1, limit=4
    $region2: #{tpu_custom_call.1} parent=1 // loop_pre_header
      _
    $region3: #{tpu_custom_call.1} parent=1 // loop_header
      %s16 = sphi 0, %s20
      %p17 = scmp.ge.s32.totalorder %s16, 4
      %s26 = sphi 0, %s28
      %s29 = sphi 0, %s26
      %s30 = sphi 0, %s29
      %s46 = sphi 0, %s30
      %s52 = sphi 0, %s54
      %s55 = sphi 0, %s52
      %s56 = sphi 0, %s55
      %s72 = sphi 0, %s56
      %s76 = sphi 0, %s76
      %s78 = sphi 0, %s76
      %s79 = sphi 0, %s78
      %s93 = sphi 0, %s79
      %s97 = sphi 0, %s97
      %s99 = sphi 0, %s97
      %s100 = sphi 0, %s99
      %s114 = sphi 0, %s100
      %s120 = sphi 0, %s122
      %s123 = sphi 0, %s120
      %s124 = sphi 0, %s123
      %s140 = sphi 0, %s124
    $region4: #{tpu_custom_call.1} parent=1 // loop_header_branch
      %19 = sbr.rel (%p17) target = $region8
    $region5: #{tpu_custom_call.1} parent=1 // loop_body
      %s21 = ssub.s32 %s16, 1
      %s22 = ssub.s32 %s16, 2
      %s23 = sadd.s32 %s16, 1
      %s24 = ssub.s32 %s16, %s23
      %p25 = scmp.eq.s32.totalorder %s24, 0
      %s27 = sadd.s32 %s26, 1
      %s28 = scalar_select %p25, %s26, %s27
      %p31 = pneg %p25
      %p32 = scmp.eq.s32.totalorder %s16, 1
      %p33 = por %p31, %p32
      %p34 = scmp.ne.s32.totalorder %s26, %s29
      %p35 = scmp.eq.s32.totalorder %s16, 0
      %p36 = por %p34, %p35
      %p37 = scmp.ne.s32.totalorder %s26, %s29
      %p38 = scmp.eq.s32.totalorder %s21, 1
      %p39 = por %p37, %p38
      %p40 = scmp.ne.s32.totalorder %s29, %s30
      %p41 = scmp.eq.s32.totalorder %s21, 0
      %p42 = por %p40, %p41
      %p43 = scmp.ne.s32.totalorder %s29, %s30
      %p44 = scmp.eq.s32.totalorder %s22, 1
      %p45 = por %p43, %p44
      %p47 = scmp.ne.s32.totalorder %s30, %s46
      %p48 = scmp.eq.s32.totalorder %s22, 0
      %p49 = por %p47, %p48
      %s50 = ssub.s32 %s16, %s23
      %p51 = scmp.eq.s32.totalorder %s50, 0
      %s53 = sadd.s32 %s52, 1
      %s54 = scalar_select %p51, %s52, %s53
      %p57 = pneg %p51
      %p58 = scmp.eq.s32.totalorder %s16, 1
      %p59 = por %p57, %p58
      %p60 = scmp.ne.s32.totalorder %s52, %s55
      %p61 = scmp.eq.s32.totalorder %s16, 0
      %p62 = por %p60, %p61
      %p63 = scmp.ne.s32.totalorder %s52, %s55
      %p64 = scmp.eq.s32.totalorder %s21, 1
      %p65 = por %p63, %p64
      %p66 = scmp.ne.s32.totalorder %s55, %s56
      %p67 = scmp.eq.s32.totalorder %s21, 0
      %p68 = por %p66, %p67
      %p69 = scmp.ne.s32.totalorder %s55, %s56
      %p70 = scmp.eq.s32.totalorder %s22, 1
      %p71 = por %p69, %p70
      %p73 = scmp.ne.s32.totalorder %s56, %s72
      %p74 = scmp.eq.s32.totalorder %s22, 0
      %p75 = por %p73, %p74
      %s77 = sadd.s32 %s76, 1
      %p80 = scmp.eq.s32.totalorder %s16, 1
      %p81 = scmp.ne.s32.totalorder %s76, %s78
      %p82 = scmp.eq.s32.totalorder %s16, 0
      %p83 = por %p81, %p82
      %p84 = scmp.ne.s32.totalorder %s76, %s78
      %p85 = scmp.eq.s32.totalorder %s21, 1
      %p86 = por %p84, %p85
      %p87 = scmp.ne.s32.totalorder %s78, %s79
      %p88 = scmp.eq.s32.totalorder %s21, 0
      %p89 = por %p87, %p88
      %p90 = scmp.ne.s32.totalorder %s78, %s79
      %p91 = scmp.eq.s32.totalorder %s22, 1
      %p92 = por %p90, %p91
      %p94 = scmp.ne.s32.totalorder %s79, %s93
      %p95 = scmp.eq.s32.totalorder %s22, 0
      %p96 = por %p94, %p95
      %s98 = sadd.s32 %s97, 1
      %p101 = scmp.eq.s32.totalorder %s16, 1
      %p102 = scmp.ne.s32.totalorder %s97, %s99
      %p103 = scmp.eq.s32.totalorder %s16, 0
      %p104 = por %p102, %p103
      %p105 = scmp.ne.s32.totalorder %s97, %s99
      %p106 = scmp.eq.s32.totalorder %s21, 1
      %p107 = por %p105, %p106
      %p108 = scmp.ne.s32.totalorder %s99, %s100
      %p109 = scmp.eq.s32.totalorder %s21, 0
      %p110 = por %p108, %p109
      %p111 = scmp.ne.s32.totalorder %s99, %s100
      %p112 = scmp.eq.s32.totalorder %s22, 1
      %p113 = por %p111, %p112
      %p115 = scmp.ne.s32.totalorder %s100, %s114
      %p116 = scmp.eq.s32.totalorder %s22, 0
      %p117 = por %p115, %p116
      %s118 = ssub.s32 %s16, %s23
      %p119 = scmp.eq.s32.totalorder %s118, 0
      %s121 = sadd.s32 %s120, 1
      %s122 = scalar_select %p119, %s120, %s121
      %p125 = pneg %p119
      %p126 = scmp.eq.s32.totalorder %s16, 1
      %p127 = por %p125, %p126
      %p128 = scmp.ne.s32.totalorder %s120, %s123
      %p129 = scmp.eq.s32.totalorder %s16, 0
      %p130 = por %p128, %p129
      %p131 = scmp.ne.s32.totalorder %s120, %s123
      %p132 = scmp.eq.s32.totalorder %s21, 1
      %p133 = por %p131, %p132
      %p134 = scmp.ne.s32.totalorder %s123, %s124
      %p135 = scmp.eq.s32.totalorder %s21, 0
      %p136 = por %p134, %p135
      %p137 = scmp.ne.s32.totalorder %s123, %s124
      %p138 = scmp.eq.s32.totalorder %s22, 1
      %p139 = por %p137, %p138
      %p141 = scmp.ne.s32.totalorder %s124, %s140
      %p142 = scmp.eq.s32.totalorder %s22, 0
      %p143 = por %p141, %p142
      %p144 = scmp.le.s32.totalorder 1, %s16
      %p145 = scmp.lt.s32.totalorder %s16, 3
      %p146 = pnand %p144, %p145
      %p147 = pneg %p146
      // Predicated region
      $region9: #{tpu_custom_call.1} parent=5 // pred_check
        _
      $region10: #{tpu_custom_call.1} parent=5 // pred_check_branch
        %149 = sbr.rel (%p146) target = $region12
      $region11: #{tpu_custom_call.1} parent=5 // pred_region
        %s150 = ssub.s32 %s16, 1
        // Predicated region
        $region13: #{tpu_custom_call.1} parent=11 // pred_check
          %p151 = pneg %p89
        $region14: #{tpu_custom_call.1} parent=11 // pred_check_branch
          %153 = sbr.rel (%p151) target = $region16
        $region15: #{tpu_custom_call.1} parent=11 // pred_region
          _
        $region16: #{tpu_custom_call.1} parent=11 // pred_fallthru
          _
        // Predicated region
        $region17: #{tpu_custom_call.1} parent=11 // pred_check
          %p154 = pneg %p110
        $region18: #{tpu_custom_call.1} parent=11 // pred_check_branch
          %156 = sbr.rel (%p154) target = $region20
        $region19: #{tpu_custom_call.1} parent=11 // pred_region
          _
        $region20: #{tpu_custom_call.1} parent=11 // pred_fallthru
          _
      $region12: #{tpu_custom_call.1} parent=5 // pred_fallthru
        _
      %p157 = scmp.lt.s32.totalorder %s16, 2
      // Predicated region
      $region21: #{tpu_custom_call.1} parent=5 // pred_check
        %p158 = pneg %p157
      $region22: #{tpu_custom_call.1} parent=5 // pred_check_branch
        %160 = sbr.rel (%p158) target = $region24
      $region23: #{tpu_custom_call.1} parent=5 // pred_region
        // Predicated region
        $region25: #{tpu_custom_call.1} parent=23 // pred_check
          %p161 = pneg %p36
        $region26: #{tpu_custom_call.1} parent=23 // pred_check_branch
          %163 = sbr.rel (%p161) target = $region28
        $region27: #{tpu_custom_call.1} parent=23 // pred_region
          %s164 = sand.u32 %s26, 1
          %s165 = scalar_lea.sflag [#allocation3], %s164
          %s166 = sand.u32 %s26, 1
          %s167 = smul.addr %s166, 64
          %s168 = scalar_lea.vmem [#allocation2], %s167
          %s169 = smul.u32 4, %s16
          %s171 = ssub.s32 1024, 1024
          %172 = vsyncadd %s165, %s171
          %s173 = smul.addr %s169, 2
          %s174 = smul.addr %s173, 128
          %s175 = scalar_lea.hbm %s0, %s174
          %s176 = sshll.u32 %s168, 4
          %s177 = int_to_ptr.vmem [resolvable:$true] %s176
          %182 = dma.hbm_to_vmem [thread:$0]  %s175, 1024, %s177, %s165, 128, 128, 8
        $region28: #{tpu_custom_call.1} parent=23 // pred_fallthru
          _
        // Predicated region
        $region29: #{tpu_custom_call.1} parent=23 // pred_check
          %p183 = pneg %p62
        $region30: #{tpu_custom_call.1} parent=23 // pred_check_branch
          %185 = sbr.rel (%p183) target = $region32
        $region31: #{tpu_custom_call.1} parent=23 // pred_region
          %s186 = sand.u32 %s52, 1
          %s187 = scalar_lea.sflag [#allocation5], %s186
          %s188 = sand.u32 %s52, 1
          %s189 = smul.addr %s188, 64
          %s190 = scalar_lea.vmem [#allocation4], %s189
          %s191 = smul.u32 4, %s16
          %s193 = ssub.s32 1024, 1024
          %194 = vsyncadd %s187, %s193
          %s195 = smul.addr %s191, 2
          %s196 = smul.addr %s195, 128
          %s197 = scalar_lea.hbm %s1, %s196
          %s198 = sshll.u32 %s190, 4
          %s199 = int_to_ptr.vmem [resolvable:$true] %s198
          %204 = dma.hbm_to_vmem [thread:$0]  %s197, 1024, %s199, %s187, 128, 128, 8
        $region32: #{tpu_custom_call.1} parent=23 // pred_fallthru
          _
      $region24: #{tpu_custom_call.1} parent=5 // pred_fallthru
        _
      %p205 = scmp.le.s32.totalorder 1, %s16
      %p206 = scmp.lt.s32.totalorder %s16, 3
      %p207 = pnand %p205, %p206
      %p208 = pneg %p207
      // Predicated region
      $region33: #{tpu_custom_call.1} parent=5 // pred_check
        _
      $region34: #{tpu_custom_call.1} parent=5 // pred_check_branch
        %210 = sbr.rel (%p207) target = $region36
      $region35: #{tpu_custom_call.1} parent=5 // pred_region
        %s211 = ssub.s32 %s16, 1
        %s212 = sand.u32 %s29, 1
        %s213 = scalar_lea.sflag [#allocation3], %s212
        %s214 = sand.u32 %s29, 1
        %s215 = smul.addr %s214, 64
        %s216 = scalar_lea.vmem [#allocation2], %s215
        // Predicated region
        $region37: #{tpu_custom_call.1} parent=35 // pred_check
          %p217 = pneg %p42
        $region38: #{tpu_custom_call.1} parent=35 // pred_check_branch
          %219 = sbr.rel (%p217) target = $region40
        $region39: #{tpu_custom_call.1} parent=35 // pred_region
          %220 = dma.done %s213, 1024
        $region40: #{tpu_custom_call.1} parent=35 // pred_fallthru
          _
        %s221 = sand.u32 %s55, 1
        %s222 = scalar_lea.sflag [#allocation5], %s221
        %s223 = sand.u32 %s55, 1
        %s224 = smul.addr %s223, 64
        %s225 = scalar_lea.vmem [#allocation4], %s224
        // Predicated region
        $region41: #{tpu_custom_call.1} parent=35 // pred_check
          %p226 = pneg %p68
        $region42: #{tpu_custom_call.1} parent=35 // pred_check_branch
          %228 = sbr.rel (%p226) target = $region44
        $region43: #{tpu_custom_call.1} parent=35 // pred_region
          %229 = dma.done %s222, 1024
        $region44: #{tpu_custom_call.1} parent=35 // pred_fallthru
          _
        %s230 = sand.u32 %s29, 1
        %s231 = scalar_lea.sflag [#allocation3], %s230
        %s232 = sand.u32 %s29, 1
        %s233 = smul.addr %s232, 64
        %s234 = scalar_lea.vmem [#allocation2], %s233
        %p235 = pneg %p42
        %p236 = pneg %p39
        %s237 = sand.u32 %s55, 1
        %s238 = scalar_lea.sflag [#allocation5], %s237
        %s239 = sand.u32 %s55, 1
        %s240 = smul.addr %s239, 64
        %s241 = scalar_lea.vmem [#allocation4], %s240
        %p242 = pneg %p68
        %p243 = pneg %p65
        %p244 = pneg %p89
        %p245 = pneg %p86
        %p246 = pneg %p110
        %p247 = pneg %p107
        %p248 = pneg %p136
        %p249 = pneg %p133
        %p250 = scmp.lt.s32.totalorder %s21, 1
        %s251 = scalar_select %p250, %s21, 1
        %s252 = smul.addr %s251, 8
        %s253 = scalar_lea.vmem %s4, %s252
        %s254 = smul.u32 4, %s21
        %s255 = smul.u32 4, %s21
        %p256 = scmp.lt.s32.totalorder %s21, 1
        %s257 = scalar_select %p256, %s21, 1
        %s258 = smul.addr %s257, 8
        %s259 = scalar_lea.vmem %s4, %s258
        %v260 = vld [vmem:[%s216] sm:$0xff]
        %v261 = vld [vmem:[%s216 + $0x8] sm:$0xff]
        %v262 = vld [vmem:[%s216 + $0x10] sm:$0xff]
        %v263 = vld [vmem:[%s216 + $0x18] sm:$0xff]
        %v264 = vld [vmem:[%s216 + $0x20] sm:$0xff]
        %v265 = vld [vmem:[%s216 + $0x28] sm:$0xff]
        %v266 = vld [vmem:[%s216 + $0x30] sm:$0xff]
        %v267 = vld [vmem:[%s216 + $0x38] sm:$0xff]
        %v268 = vld [vmem:[%s225] sm:$0xff]
        %v269 = vld [vmem:[%s225 + $0x8] sm:$0xff]
        %v270 = vld [vmem:[%s225 + $0x10] sm:$0xff]
        %v271 = vld [vmem:[%s225 + $0x18] sm:$0xff]
        %v272 = vld [vmem:[%s225 + $0x20] sm:$0xff]
        %v273 = vld [vmem:[%s225 + $0x28] sm:$0xff]
        %v274 = vld [vmem:[%s225 + $0x30] sm:$0xff]
        %v275 = vld [vmem:[%s225 + $0x38] sm:$0xff]
        %v276 = vsub.f32 %v260, %v268
        %v277 = vsub.f32 %v261, %v269
        %v278 = vsub.f32 %v262, %v270
        %v279 = vsub.f32 %v263, %v271
        %v280 = vsub.f32 %v264, %v272
        %v281 = vsub.f32 %v265, %v273
        %v282 = vsub.f32 %v266, %v274
        %v283 = vsub.f32 %v267, %v275
        %vm284 = vcmask 128000
        %285 = vst.msk [vmem:[%s259] sm:$0x3f] %vm284, 0.0
        %vm294 = vcmask 1040384
        %v295 = vrot.slane %v276, 7
        %v296 = vrot.slane %v277, 7
        %v297 = vsel %vm294, %v295, %v296
        %v298 = vrot.slane %v278, 7
        %v299 = vrot.slane %v279, 7
        %v300 = vsel %vm294, %v298, %v299
        %v301 = vrot.slane %v280, 7
        %v302 = vrot.slane %v281, 7
        %v303 = vsel %vm294, %v301, %v302
        %v304 = vrot.slane %v282, 7
        %v305 = vrot.slane %v283, 7
        %v306 = vsel %vm294, %v304, %v305
        %v315 = vsub.f32 %v276, %v295
        %v316 = vsub.f32 %v277, %v297
        %v317 = vsub.f32 %v278, %v298
        %v318 = vsub.f32 %v279, %v300
        %v319 = vsub.f32 %v280, %v301
        %v320 = vsub.f32 %v281, %v303
        %v321 = vsub.f32 %v282, %v304
        %v322 = vsub.f32 %v283, %v306
        %v323 = vand.u32 2147483647, %v315
        %v324 = vand.u32 2147483647, %v316
        %v325 = vand.u32 2147483647, %v317
        %v326 = vand.u32 2147483647, %v318
        %v327 = vand.u32 2147483647, %v319
        %v328 = vand.u32 2147483647, %v320
        %v329 = vand.u32 2147483647, %v321
        %v330 = vand.u32 2147483647, %v322
        %vm331 = vcmask 130049
        %v332 = vsel %vm331, %v323, 0.0
        %v333 = vsel %vm331, %v325, 0.0
        %v334 = vadd.f32 %v332, %v333
        %v335 = vsel %vm331, %v327, 0.0
        %v336 = vadd.f32 %v334, %v335
        %v337 = vsel %vm331, %v329, 0.0
        %v338 = vadd.f32 %v336, %v337
        %vm339 = vcmask 130048
        %v340 = vsel %vm339, %v324, 0.0
        %v341 = vsel %vm339, %v326, 0.0
        %v342 = vadd.f32 %v340, %v341
        %v343 = vsel %vm339, %v328, 0.0
        %v344 = vadd.f32 %v342, %v343
        %v345 = vsel %vm339, %v330, 0.0
        %v346 = vadd.f32 %v344, %v345
        %vm349 = vcmask 1046528
        %v350 = vrot.slane %v338, 1
        %v351 = vrot.slane %v346, 1
        %v352 = vsel %vm349, %v350, %v351
        %v355 = vsel %vm339, %v352, 0.0
        %vm356 = vcmask 129024
        %v357 = vsel %vm356, %v351, 0.0
        %v358 = vadd.f32 %v355, %v357
        %v359 = vrot.slane %v358, 4
        %v360 = vadd.f32 %v358, %v359
        %v361 = vrot.slane %v360, 2
        %v362 = vadd.f32 %v360, %v361
        %v363 = vrot.slane %v362, 1
        %v364 = vadd.f32 %v362, %v363
        %vm365 = vcmask 122880
        %366 = vst.msk [vmem:[%s259] sm:$0x1] %vm365, %v364
        %367 = vrot.lane.b32.xlu0 %v276, 1
        %v368 = vpop.permute.xlu0 %367
        %369 = vrot.lane.b32.xlu0 %v277, 1
        %v370 = vpop.permute.xlu0 %369
        %371 = vrot.lane.b32.xlu0 %v278, 1
        %v372 = vpop.permute.xlu0 %371
        %373 = vrot.lane.b32.xlu0 %v279, 1
        %v374 = vpop.permute.xlu0 %373
        %375 = vrot.lane.b32.xlu0 %v280, 1
        %v376 = vpop.permute.xlu0 %375
        %377 = vrot.lane.b32.xlu0 %v281, 1
        %v378 = vpop.permute.xlu0 %377
        %379 = vrot.lane.b32.xlu0 %v282, 1
        %v380 = vpop.permute.xlu0 %379
        %381 = vrot.lane.b32.xlu0 %v283, 1
        %v382 = vpop.permute.xlu0 %381
        %v391 = vsub.f32 %v276, %v368
        %v392 = vsub.f32 %v277, %v370
        %v393 = vsub.f32 %v278, %v372
        %v394 = vsub.f32 %v279, %v374
        %v395 = vsub.f32 %v280, %v376
        %v396 = vsub.f32 %v281, %v378
        %v397 = vsub.f32 %v282, %v380
        %v398 = vsub.f32 %v283, %v382
        %v399 = vand.u32 2147483647, %v391
        %v400 = vand.u32 2147483647, %v392
        %v401 = vand.u32 2147483647, %v393
        %v402 = vand.u32 2147483647, %v394
        %v403 = vand.u32 2147483647, %v395
        %v404 = vand.u32 2147483647, %v396
        %v405 = vand.u32 2147483647, %v397
        %v406 = vand.u32 2147483647, %v398
        %vm407 = vcmask 130056
        %v408 = vsel %vm407, %v399, 0.0
        %v409 = vsel %vm407, %v401, 0.0
        %v410 = vadd.f32 %v408, %v409
        %v411 = vsel %vm407, %v403, 0.0
        %v412 = vadd.f32 %v410, %v411
        %v413 = vsel %vm407, %v405, 0.0
        %v414 = vadd.f32 %v412, %v413
        %v415 = vsel %vm407, %v400, 0.0
        %v416 = vsel %vm407, %v402, 0.0
        %v417 = vadd.f32 %v415, %v416
        %v418 = vsel %vm407, %v404, 0.0
        %v419 = vadd.f32 %v417, %v418
        %v420 = vsel %vm407, %v406, 0.0
        %v421 = vadd.f32 %v419, %v420
        %v422 = vsel %vm407, %v414, 0.0
        %v423 = vsel %vm407, %v421, 0.0
        %v424 = vadd.f32 %v422, %v423
        %v425 = vrot.slane %v424, 4
        %v426 = vadd.f32 %v424, %v425
        %v427 = vrot.slane %v426, 2
        %v428 = vadd.f32 %v426, %v427
        %v429 = vrot.slane %v428, 1
        %v430 = vadd.f32 %v428, %v429
        %432 = vrot.lane.b32.xlu0 %v430, 127
        %v433 = vpop.permute.xlu0 %432
        %vm435 = vcmask 114688
        %436 = vst.msk [vmem:[%s259 + $0x1] sm:$0x1] %vm435, %v433
        %vm437 = vcmask 1041408
        %v438 = vrot.slane %v276, 6
        %v439 = vrot.slane %v277, 6
        %v440 = vsel %vm437, %v438, %v439
        %v441 = vrot.slane %v278, 6
        %v442 = vrot.slane %v279, 6
        %v443 = vsel %vm437, %v441, %v442
        %v444 = vrot.slane %v280, 6
        %v445 = vrot.slane %v281, 6
        %v446 = vsel %vm437, %v444, %v445
        %v447 = vrot.slane %v282, 6
        %v448 = vrot.slane %v283, 6
        %v449 = vsel %vm437, %v447, %v448
        %v458 = vsub.f32 %v276, %v438
        %v459 = vsub.f32 %v277, %v440
        %v460 = vsub.f32 %v278, %v441
        %v461 = vsub.f32 %v279, %v443
        %v462 = vsub.f32 %v280, %v444
        %v463 = vsub.f32 %v281, %v446
        %v464 = vsub.f32 %v282, %v447
        %v465 = vsub.f32 %v283, %v449
        %v466 = vand.u32 2147483647, %v458
        %v467 = vand.u32 2147483647, %v459
        %v468 = vand.u32 2147483647, %v460
        %v469 = vand.u32 2147483647, %v461
        %v470 = vand.u32 2147483647, %v462
        %v471 = vand.u32 2147483647, %v463
        %v472 = vand.u32 2147483647, %v464
        %v473 = vand.u32 2147483647, %v465
        %vm474 = vcmask 130050
        %v475 = vsel %vm474, %v466, 0.0
        %v476 = vsel %vm474, %v468, 0.0
        %v477 = vadd.f32 %v475, %v476
        %v478 = vsel %vm474, %v470, 0.0
        %v479 = vadd.f32 %v477, %v478
        %v480 = vsel %vm474, %v472, 0.0
        %v481 = vadd.f32 %v479, %v480
        %v482 = vsel %vm339, %v467, 0.0
        %v483 = vsel %vm339, %v469, 0.0
        %v484 = vadd.f32 %v482, %v483
        %v485 = vsel %vm339, %v471, 0.0
        %v486 = vadd.f32 %v484, %v485
        %v487 = vsel %vm339, %v473, 0.0
        %v488 = vadd.f32 %v486, %v487
        %s489 = scalar_lea.vmem %s2, 16
        %v490 = vld [vmem:[%s489] sm:$0xff]
        %v491 = vld [vmem:[%s489 + $0x8] sm:$0x3f]
        %493 = vset.pattern.permute.xlu0 0
        %494 = vperm.xlu0 %493, %v490
        %v495 = vpop.permute.xlu0 %494
        %497 = vset.pattern.permute.xlu0 0
        %498 = vperm.xlu0 %497, %v491
        %v499 = vpop.permute.xlu0 %498
        %v500 = vrot.slane %v495, 6
        %v501 = vrot.slane %v499, 6
        %v502 = vsel %vm437, %v500, %v501
        %v505 = vmul.f32 %v481, %v500
        %v506 = vmul.f32 %v488, %v502
        %vm509 = vcmask 1045504
        %v510 = vrot.slane %v505, 2
        %v511 = vrot.slane %v506, 2
        %v512 = vsel %vm509, %v510, %v511
        %v515 = vsel %vm339, %v512, 0.0
        %v516 = vsel %vm284, %v511, 0.0
        %v517 = vadd.f32 %v515, %v516
        %v518 = vrot.slane %v517, 4
        %v519 = vadd.f32 %v517, %v518
        %v520 = vrot.slane %v519, 2
        %v521 = vadd.f32 %v519, %v520
        %v522 = vrot.slane %v521, 1
        %v523 = vadd.f32 %v521, %v522
        %s524 = scalar_lea.vmem %s3, 1
        %v525 = vld [vmem:[%s524] sm:$0x1]
        %v526 = vmul.f32 %v523, %v525
        %527 = vst.msk [vmem:[%s259 + $0x2] sm:$0x1] %vm365, %v526
        %528 = vrot.lane.b32.xlu0 %v276, 2
        %v529 = vpop.permute.xlu0 %528
        %530 = vrot.lane.b32.xlu0 %v277, 2
        %v531 = vpop.permute.xlu0 %530
        %532 = vrot.lane.b32.xlu0 %v278, 2
        %v533 = vpop.permute.xlu0 %532
        %534 = vrot.lane.b32.xlu0 %v279, 2
        %v535 = vpop.permute.xlu0 %534
        %536 = vrot.lane.b32.xlu0 %v280, 2
        %v537 = vpop.permute.xlu0 %536
        %538 = vrot.lane.b32.xlu0 %v281, 2
        %v539 = vpop.permute.xlu0 %538
        %540 = vrot.lane.b32.xlu0 %v282, 2
        %v541 = vpop.permute.xlu0 %540
        %542 = vrot.lane.b32.xlu0 %v283, 2
        %v543 = vpop.permute.xlu0 %542
        %v552 = vsub.f32 %v276, %v529
        %v553 = vsub.f32 %v277, %v531
        %v554 = vsub.f32 %v278, %v533
        %v555 = vsub.f32 %v279, %v535
        %v556 = vsub.f32 %v280, %v537
        %v557 = vsub.f32 %v281, %v539
        %v558 = vsub.f32 %v282, %v541
        %v559 = vsub.f32 %v283, %v543
        %v560 = vand.u32 2147483647, %v552
        %v561 = vand.u32 2147483647, %v553
        %v562 = vand.u32 2147483647, %v554
        %v563 = vand.u32 2147483647, %v555
        %v564 = vand.u32 2147483647, %v556
        %v565 = vand.u32 2147483647, %v557
        %v566 = vand.u32 2147483647, %v558
        %v567 = vand.u32 2147483647, %v559
        %vm568 = vcmask 130064
        %v569 = vsel %vm568, %v560, 0.0
        %v570 = vsel %vm568, %v562, 0.0
        %v571 = vadd.f32 %v569, %v570
        %v572 = vsel %vm568, %v564, 0.0
        %v573 = vadd.f32 %v571, %v572
        %v574 = vsel %vm568, %v566, 0.0
        %v575 = vadd.f32 %v573, %v574
        %v576 = vsel %vm568, %v561, 0.0
        %v577 = vsel %vm568, %v563, 0.0
        %v578 = vadd.f32 %v576, %v577
        %v579 = vsel %vm568, %v565, 0.0
        %v580 = vadd.f32 %v578, %v579
        %v581 = vsel %vm568, %v567, 0.0
        %v582 = vadd.f32 %v580, %v581
        %v583 = vld [vmem:[%s489] sm:$0xff]
        %v584 = vld [vmem:[%s489 + $0x8] sm:$0xff]
        %586 = vset.pattern.permute.xlu0 0
        %587 = vperm.xlu0 %586, %v583
        %v588 = vpop.permute.xlu0 %587
        %591 = vset.pattern.permute.xlu0 0
        %592 = vperm.xlu0 %591, %v584
        %v593 = vpop.permute.xlu0 %592
        %v595 = vmul.f32 %v575, %v588
        %v596 = vmul.f32 %v582, %v593
        %v597 = vsel %vm568, %v595, 0.0
        %v598 = vsel %vm568, %v596, 0.0
        %v599 = vadd.f32 %v597, %v598
        %v600 = vrot.slane %v599, 4
        %v601 = vadd.f32 %v599, %v600
        %v602 = vrot.slane %v601, 2
        %v603 = vadd.f32 %v601, %v602
        %v604 = vrot.slane %v603, 1
        %v605 = vadd.f32 %v603, %v604
        %v606 = vld [vmem:[%s524] sm:$0x1]
        %v608 = vlaneseq
        %v609 = vshrl.u32 %v608, 7
        %v610 = vsub.s32 0, %v609
        %v611 = vrot.slane %v606, %v610
        %612 = vrot.lane.b32.xlu0 %v611, 2
        %v613 = vpop.permute.xlu0 %612
        %v615 = vmul.f32 %v605, %v613
        %617 = vrot.lane.b32.xlu0 %v615, 126
        %v618 = vpop.permute.xlu0 %617
        %vm620 = vcmask 106496
        %621 = vst.msk [vmem:[%s259 + $0x3] sm:$0x1] %vm620, %v618
        %vm622 = vcmask 1043456
        %v623 = vrot.slane %v276, 4
        %v624 = vrot.slane %v277, 4
        %v625 = vsel %vm622, %v623, %v624
        %v626 = vrot.slane %v278, 4
        %v627 = vrot.slane %v279, 4
        %v628 = vsel %vm622, %v626, %v627
        %v629 = vrot.slane %v280, 4
        %v630 = vrot.slane %v281, 4
        %v631 = vsel %vm622, %v629, %v630
        %v632 = vrot.slane %v282, 4
        %v633 = vrot.slane %v283, 4
        %v634 = vsel %vm622, %v632, %v633
        %v643 = vsub.f32 %v276, %v623
        %v644 = vsub.f32 %v277, %v625
        %v645 = vsub.f32 %v278, %v626
        %v646 = vsub.f32 %v279, %v628
        %v647 = vsub.f32 %v280, %v629
        %v648 = vsub.f32 %v281, %v631
        %v649 = vsub.f32 %v282, %v632
        %v650 = vsub.f32 %v283, %v634
        %v651 = vand.u32 2147483647, %v643
        %v652 = vand.u32 2147483647, %v644
        %v653 = vand.u32 2147483647, %v645
        %v654 = vand.u32 2147483647, %v646
        %v655 = vand.u32 2147483647, %v647
        %v656 = vand.u32 2147483647, %v648
        %v657 = vand.u32 2147483647, %v649
        %v658 = vand.u32 2147483647, %v650
        %vm659 = vcmask 130052
        %v660 = vsel %vm659, %v651, 0.0
        %v661 = vsel %vm659, %v653, 0.0
        %v662 = vadd.f32 %v660, %v661
        %v663 = vsel %vm659, %v655, 0.0
        %v664 = vadd.f32 %v662, %v663
        %v665 = vsel %vm659, %v657, 0.0
        %v666 = vadd.f32 %v664, %v665
        %v667 = vsel %vm339, %v652, 0.0
        %v668 = vsel %vm339, %v654, 0.0
        %v669 = vadd.f32 %v667, %v668
        %v670 = vsel %vm339, %v656, 0.0
        %v671 = vadd.f32 %v669, %v670
        %v672 = vsel %vm339, %v658, 0.0
        %v673 = vadd.f32 %v671, %v672
        %s674 = scalar_lea.vmem %s2, 32
        %v675 = vld [vmem:[%s674] sm:$0xff]
        %v676 = vld [vmem:[%s674 + $0x8] sm:$0xf]
        %678 = vset.pattern.permute.xlu0 0
        %679 = vperm.xlu0 %678, %v675
        %v680 = vpop.permute.xlu0 %679
        %682 = vset.pattern.permute.xlu0 0
        %683 = vperm.xlu0 %682, %v676
        %v684 = vpop.permute.xlu0 %683
        %v685 = vrot.slane %v680, 4
        %v686 = vrot.slane %v684, 4
        %v687 = vsel %vm622, %v685, %v686
        %v690 = vmul.f32 %v666, %v685
        %v691 = vmul.f32 %v673, %v687
        %v694 = vrot.slane %v690, 4
        %v695 = vrot.slane %v691, 4
        %v696 = vsel %vm622, %v694, %v695
        %v699 = vsel %vm339, %v696, 0.0
        %vm700 = vcmask 125952
        %v701 = vsel %vm700, %v695, 0.0
        %v702 = vadd.f32 %v699, %v701
        %v703 = vrot.slane %v702, 4
        %v704 = vadd.f32 %v702, %v703
        %v705 = vrot.slane %v704, 2
        %v706 = vadd.f32 %v704, %v705
        %v707 = vrot.slane %v706, 1
        %v708 = vadd.f32 %v706, %v707
        %s709 = scalar_lea.vmem %s3, 2
        %v710 = vld [vmem:[%s709] sm:$0x1]
        %v711 = vmul.f32 %v708, %v710
        %712 = vst.msk [vmem:[%s259 + $0x4] sm:$0x1] %vm365, %v711
        %713 = vrot.lane.b32.xlu0 %v276, 4
        %v714 = vpop.permute.xlu0 %713
        %715 = vrot.lane.b32.xlu0 %v277, 4
        %v716 = vpop.permute.xlu0 %715
        %717 = vrot.lane.b32.xlu0 %v278, 4
        %v718 = vpop.permute.xlu0 %717
        %719 = vrot.lane.b32.xlu0 %v279, 4
        %v720 = vpop.permute.xlu0 %719
        %721 = vrot.lane.b32.xlu0 %v280, 4
        %v722 = vpop.permute.xlu0 %721
        %723 = vrot.lane.b32.xlu0 %v281, 4
        %v724 = vpop.permute.xlu0 %723
        %725 = vrot.lane.b32.xlu0 %v282, 4
        %v726 = vpop.permute.xlu0 %725
        %727 = vrot.lane.b32.xlu0 %v283, 4
        %v728 = vpop.permute.xlu0 %727
        %v737 = vsub.f32 %v276, %v714
        %v738 = vsub.f32 %v277, %v716
        %v739 = vsub.f32 %v278, %v718
        %v740 = vsub.f32 %v279, %v720
        %v741 = vsub.f32 %v280, %v722
        %v742 = vsub.f32 %v281, %v724
        %v743 = vsub.f32 %v282, %v726
        %v744 = vsub.f32 %v283, %v728
        %v745 = vand.u32 2147483647, %v737
        %v746 = vand.u32 2147483647, %v738
        %v747 = vand.u32 2147483647, %v739
        %v748 = vand.u32 2147483647, %v740
        %v749 = vand.u32 2147483647, %v741
        %v750 = vand.u32 2147483647, %v742
        %v751 = vand.u32 2147483647, %v743
        %v752 = vand.u32 2147483647, %v744
        %vm753 = vcmask 130080
        %v754 = vsel %vm753, %v745, 0.0
        %v755 = vsel %vm753, %v747, 0.0
        %v756 = vadd.f32 %v754, %v755
        %v757 = vsel %vm753, %v749, 0.0
        %v758 = vadd.f32 %v756, %v757
        %v759 = vsel %vm753, %v751, 0.0
        %v760 = vadd.f32 %v758, %v759
        %v761 = vsel %vm753, %v746, 0.0
        %v762 = vsel %vm753, %v748, 0.0
        %v763 = vadd.f32 %v761, %v762
        %v764 = vsel %vm753, %v750, 0.0
        %v765 = vadd.f32 %v763, %v764
        %v766 = vsel %vm753, %v752, 0.0
        %v767 = vadd.f32 %v765, %v766
        %v768 = vld [vmem:[%s674] sm:$0xff]
        %v769 = vld [vmem:[%s674 + $0x8] sm:$0xff]
        %771 = vset.pattern.permute.xlu0 0
        %772 = vperm.xlu0 %771, %v768
        %v773 = vpop.permute.xlu0 %772
        %776 = vset.pattern.permute.xlu0 0
        %777 = vperm.xlu0 %776, %v769
        %v778 = vpop.permute.xlu0 %777
        %v780 = vmul.f32 %v760, %v773
        %v781 = vmul.f32 %v767, %v778
        %v782 = vsel %vm753, %v780, 0.0
        %v783 = vsel %vm753, %v781, 0.0
        %v784 = vadd.f32 %v782, %v783
        %v785 = vrot.slane %v784, 4
        %v786 = vadd.f32 %v784, %v785
        %v787 = vrot.slane %v786, 2
        %v788 = vadd.f32 %v786, %v787
        %v789 = vrot.slane %v788, 1
        %v790 = vadd.f32 %v788, %v789
        %v791 = vld [vmem:[%s709] sm:$0x1]
        %v793 = vlaneseq
        %v794 = vshrl.u32 %v793, 7
        %v795 = vsub.s32 0, %v794
        %v796 = vrot.slane %v791, %v795
        %797 = vrot.lane.b32.xlu0 %v796, 4
        %v798 = vpop.permute.xlu0 %797
        %v800 = vmul.f32 %v790, %v798
        %802 = vrot.lane.b32.xlu0 %v800, 124
        %v803 = vpop.permute.xlu0 %802
        %vm805 = vcmask 90112
        %806 = vst.msk [vmem:[%s259 + $0x5] sm:$0x1] %vm805, %v803
        %p807 = scmp.lt.s32.totalorder %s21, 1
        %s808 = scalar_select %p807, %s21, 1
        %s809 = smul.addr %s808, 8
        %s810 = scalar_lea.vmem %s4, %s809
        // Predicated region
        $region45: #{tpu_custom_call.1} parent=35 // pred_check
          %p811 = pneg %p133
        $region46: #{tpu_custom_call.1} parent=35 // pred_check_branch
          %813 = sbr.rel (%p811) target = $region48
        $region47: #{tpu_custom_call.1} parent=35 // pred_region
          _
        $region48: #{tpu_custom_call.1} parent=35 // pred_fallthru
          _
      $region36: #{tpu_custom_call.1} parent=5 // pred_fallthru
        _
      %p814 = scmp.le.s32.totalorder 2, %s16
      // Predicated region
      $region49: #{tpu_custom_call.1} parent=5 // pred_check
        %p815 = pneg %p814
      $region50: #{tpu_custom_call.1} parent=5 // pred_check_branch
        %817 = sbr.rel (%p815) target = $region52
      $region51: #{tpu_custom_call.1} parent=5 // pred_region
        %s818 = ssub.s32 %s16, 2
        // Predicated region
        $region53: #{tpu_custom_call.1} parent=51 // pred_check
          %p819 = pneg %p139
        $region54: #{tpu_custom_call.1} parent=51 // pred_check_branch
          %821 = sbr.rel (%p819) target = $region56
        $region55: #{tpu_custom_call.1} parent=51 // pred_region
          %p822 = scmp.lt.s32.totalorder %s22, 1
          %s823 = scalar_select %p822, %s22, 1
          %s824 = smul.addr %s823, 8
          %s825 = scalar_lea.vmem %s4, %s824
        $region56: #{tpu_custom_call.1} parent=51 // pred_fallthru
          _
      $region52: #{tpu_custom_call.1} parent=5 // pred_fallthru
        _
    $region6: #{tpu_custom_call.1} parent=1 // loop_footer
      %s20 = sadd.s32 1, %s16
    $region7: #{tpu_custom_call.1} parent=1 // loop_footer_branch
      %15 = sbr.rel target = $region3
    $region8: #{tpu_custom_call.1} parent=1 // loop_exit
      _
    %826 = vsyncpa [#allocation3], 1
    %s827 = scalar_lea.sflag [#allocation3], 1
    %828 = vsyncpa %s827, 1
    %829 = vsyncpa [#allocation5], 1
    %s830 = scalar_lea.sflag [#allocation5], 1
    %831 = vsyncpa %s830, 1

</llo_original>
